<compile_context>
chip_gen: v5e
topology: v5e:2x2
jax: 0.10.0
libtpu: 0.0.40
codegen_flags: <defaults>
</compile_context>

<pallas_src>
import jax
import jax.numpy as jnp
from jax.experimental import pallas as pl
from jax.experimental.pallas import tpu as pltpu

_EPS = 1e-5  # torch.nn.LayerNorm default


def _my_layernorm_kernel(x_ref, gamma_ref, o_ref):
    # x_ref: (Bt, L, C) block; gamma_ref: (1, 1, C) f32; o_ref: (Bt, L, C)
    x = x_ref[...].astype(jnp.float32)
    inv_c = 1.0 / x.shape[-1]
    inv_l = 1.0 / x.shape[1]

    # --- LayerNorm stats over the channel (lane) axis -----------------------
    # Two-pass variance (mean of squared deviations): robust when |mean| >> std.
    mean = jnp.sum(x, axis=-1, keepdims=True) * inv_c            # (Bt, L, 1)
    xc = x - mean                                                # (Bt, L, C)
    var = jnp.sum(xc * xc, axis=-1, keepdims=True) * inv_c       # (Bt, L, 1)
    inv_std = jax.lax.rsqrt(var + _EPS)                          # (Bt, L, 1)

    # --- seq-mean of the normalized signal, without materializing z ---------
    # mean_L(z) with z = inv_std * xc, computed as a weighted reduction of the
    # centered input (the reduce and the fused store below consume z directly).
    seq_mean = jnp.sum(inv_std * xc, axis=1, keepdims=True) * inv_l  # (Bt,1,C)

    # --- fused output: out = gamma * (z - mean_L(z)); beta cancels exactly --
    gamma = gamma_ref[...]                                       # (1, 1, C)
    o_ref[...] = (gamma * (inv_std * xc - seq_mean)).astype(o_ref.dtype)


def _vmem_cap_bytes():
    """Generation-aware scoped-VMEM cap (leave headroom below physical VMEM)."""
    try:
        kind = jax.devices()[0].device_kind.lower()
    except Exception:  # no device info at trace time -> be conservative
        kind = ""
    if ("v3" in kind) or ("v4" in kind) or ("v5" in kind) or ("v6" in kind):
        return 96 << 20   # 128 MiB physical VMEM per core
    return 48 << 20       # v7x-class (64 MiB physical per TC) / unknown: safe


def _pick_batch_tile(B, row_bytes, target_bytes, min_block_bytes, min_steps):
    """Batch-tile for a (bt, L, C) block.

    * ~target_bytes per block to amortize the ~0.35 us per-step overhead,
    * prefer >= min_steps grid steps (pipelining + v7x megacore) unless that
      would shrink blocks below min_block_bytes (HBM-roofline cliff),
    * the grid uses cdiv, so bt need not divide B (no prime-B collapse).
    """
    row_bytes = max(row_bytes, 1)
    bt = max(1, min(B, target_bytes // row_bytes))
    for steps in (min_steps, 2):
        cap = -(-B // steps)                     # ceil(B / steps)
        if cap < bt and cap * row_bytes < min_block_bytes:
            continue                             # would shrink blocks too much
        bt = min(bt, cap)
        break
    return bt


def my_layernorm(x, gamma, beta=None, *, target_block_bytes=4 << 20,
                 min_block_bytes=1 << 20, min_steps=4):
    """x: (B, L, C), gamma/beta: (C,). beta cancels exactly out of the forward
    pass (x_hat - mean_L(x_hat) = gamma * (z - mean_L(z))) and is never read.
    Returns (B, L, C)."""
    del beta
    B, L, C = x.shape

    # Hoisted parameter prep: f32, pre-broadcast to (1, 1, C) so the kernel
    # does no per-step astype / reshape (JAX does not CSE broadcast_in_dim).
    gamma3 = gamma.astype(jnp.float32).reshape(1, 1, C)

    row_bytes = L * C * x.dtype.itemsize
    bt = _pick_batch_tile(B, row_bytes, target_block_bytes,
                          min_block_bytes, min_steps)
    grid = (pl.cdiv(B, bt),)

    # Scoped-VMEM budget: double-buffered in + out blocks plus ~3 block-sized
    # f32 temporaries; floored at 32 MiB (v5e scoped default is 16 MiB) and
    # capped below physical VMEM for the detected generation.
    block_io = bt * L * C * x.dtype.itemsize
    block_f32 = bt * L * C * 4
    vmem_need = 4 * block_io + 3 * block_f32 + (1 << 20)
    vmem_bytes = int(min(_vmem_cap_bytes(), max(32 << 20, vmem_need)))

    # TODO(synk): for B == 1 on multi-TensorCore chips (v7x) with long
    # sequences, add an L-tile grid axis with a two-pass seq-mean so both
    # cores get work.
    return pl.pallas_call(
        _my_layernorm_kernel,
        out_shape=jax.ShapeDtypeStruct((B, L, C), x.dtype),
        grid_spec=pltpu.PrefetchScalarGridSpec(
            num_scalar_prefetch=0,
            grid=grid,
            in_specs=[
                pl.BlockSpec((bt, L, C), lambda b: (b, 0, 0)),
                pl.BlockSpec((1, 1, C), lambda b: (0, 0, 0)),
            ],
            out_specs=pl.BlockSpec((bt, L, C), lambda b: (b, 0, 0)),
        ),
        compiler_params=pltpu.CompilerParams(
            dimension_semantics=("parallel",),
            vmem_limit_bytes=vmem_bytes,
        ),
    )(x, gamma3)


def my_layernorm_ref(x, gamma, beta):
    """Pure-JAX reference mirroring the PyTorch forward."""
    xf = x.astype(jnp.float32)
    mean = jnp.mean(xf, axis=-1, keepdims=True)
    var = jnp.mean((xf - mean) ** 2, axis=-1, keepdims=True)
    x_hat = (xf - mean) / jnp.sqrt(var + _EPS) * gamma + beta
    bias = jnp.mean(x_hat, axis=1, keepdims=True)
    return (x_hat - bias).astype(x.dtype)


if __name__ == "__main__":
    key = jax.random.PRNGKey(0)
    kx, kg, kb, kx2 = jax.random.split(key, 4)

    # Case 1: lane-dense small shape, single block (batch=4, seq=16, C=128).
    B, L, C = 4, 16, 128
    x = jax.random.normal(kx, (B, L, C), dtype=jnp.float32)
    # Add a DC offset to exercise the two-pass variance path, and non-trivial
    # affine params to exercise gamma (and confirm beta cancellation is exact).
    x = x + 3.0
    gamma = 1.0 + 0.1 * jax.random.normal(kg, (C,), dtype=jnp.float32)
    beta = 0.1 * jax.random.normal(kb, (C,), dtype=jnp.float32)

    out = jax.block_until_ready(my_layernorm(x, gamma, beta))
    ref = my_layernorm_ref(x, gamma, beta)
    assert out.shape == (B, L, C)
    assert jnp.allclose(out, ref, atol=2e-5, rtol=2e-5), "case 1 mismatch"

    # Case 2: odd batch (B=5) with forced small tiles -> multi-step grid with a
    # partial (masked) last block; exercises the cdiv grid + pipelining path.
    B2 = 5
    x2 = jax.random.normal(kx2, (B2, L, C), dtype=jnp.float32)
    out2 = jax.block_until_ready(
        my_layernorm(x2, gamma, beta,
                     target_block_bytes=2 * L * C * 4,  # -> bt=2, grid=3 steps
                     min_block_bytes=0))
    ref2 = my_layernorm_ref(x2, gamma, beta)
    assert out2.shape == (B2, L, C)
    assert jnp.allclose(out2, ref2, atol=2e-5, rtol=2e-5), "case 2 mismatch"

    print("KERNEL_OK")
</pallas_src>

<mosaic_0001>
module attributes {stable_mosaic.version = 11 : i64} {
  func.func @_my_layernorm_kernel(%arg0: i32, %arg1: memref<4x16x128xf32, #tpu.memory_space<vmem>>, %arg2: memref<1x1x128xf32, #tpu.memory_space<vmem>>, %arg3: memref<4x16x128xf32, #tpu.memory_space<vmem>>) attributes {dimension_semantics = [#tpu.dimension_semantics<parallel>], iteration_bounds = array<i64: 1>, scalar_prefetch = 0 : i64, scratch_operands = 0 : i64, tpu.core_type = #tpu.core_type<tc>, window_params = [{transform_indices = @transform_0, window_bounds = array<i64: 4, 16, 128>}, {pipeline_mode = #tpu.pipeline_mode<synchronous>, transform_indices = @transform_1, window_bounds = array<i64: 1, 1, 128>}, {transform_indices = @transform_2, window_bounds = array<i64: 4, 16, 128>}]} {
    %c0 = arith.constant 0 : index
    %c0_0 = arith.constant 0 : index
    %c0_1 = arith.constant 0 : index
    %0 = vector.load %arg1[%c0, %c0_0, %c0_1] : memref<4x16x128xf32, #tpu.memory_space<vmem>>, vector<4x16x128xf32>
    %cst = arith.constant dense<0.000000e+00> : vector<4x16xf32>
    %1 = vector.multi_reduction <add>, %0, %cst [2] : vector<4x16x128xf32> to vector<4x16xf32>
    %2 = vector.shape_cast %1 : vector<4x16xf32> to vector<4x16x1xf32>
    %cst_2 = arith.constant 7.812500e-03 : f32
    %3 = vector.broadcast %cst_2 : f32 to vector<4x16x1xf32>
    %4 = arith.mulf %2, %3 : vector<4x16x1xf32>
    %5 = vector.broadcast %4 : vector<4x16x1xf32> to vector<4x16x128xf32>
    %6 = arith.subf %0, %5 : vector<4x16x128xf32>
    %7 = arith.mulf %6, %6 : vector<4x16x128xf32>
    %cst_3 = arith.constant dense<0.000000e+00> : vector<4x16xf32>
    %8 = vector.multi_reduction <add>, %7, %cst_3 [2] : vector<4x16x128xf32> to vector<4x16xf32>
    %9 = vector.shape_cast %8 : vector<4x16xf32> to vector<4x16x1xf32>
    %cst_4 = arith.constant 7.812500e-03 : f32
    %10 = vector.broadcast %cst_4 : f32 to vector<4x16x1xf32>
    %11 = arith.mulf %9, %10 : vector<4x16x1xf32>
    %cst_5 = arith.constant 9.99999974E-6 : f32
    %12 = vector.broadcast %cst_5 : f32 to vector<4x16x1xf32>
    %13 = arith.addf %11, %12 : vector<4x16x1xf32>
    %14 = math.rsqrt %13 : vector<4x16x1xf32>
    %15 = vector.broadcast %14 : vector<4x16x1xf32> to vector<4x16x128xf32>
    %16 = arith.mulf %15, %6 : vector<4x16x128xf32>
    %cst_6 = arith.constant dense<0.000000e+00> : vector<4x128xf32>
    %17 = vector.multi_reduction <add>, %16, %cst_6 [1] : vector<4x16x128xf32> to vector<4x128xf32>
    %18 = vector.shape_cast %17 : vector<4x128xf32> to vector<4x1x128xf32>
    %cst_7 = arith.constant 6.250000e-02 : f32
    %19 = vector.broadcast %cst_7 : f32 to vector<4x1x128xf32>
    %20 = arith.mulf %18, %19 : vector<4x1x128xf32>
    %c0_8 = arith.constant 0 : index
    %c0_9 = arith.constant 0 : index
    %c0_10 = arith.constant 0 : index
    %21 = vector.load %arg2[%c0_8, %c0_9, %c0_10] : memref<1x1x128xf32, #tpu.memory_space<vmem>>, vector<1x1x128xf32>
    %22 = vector.broadcast %14 : vector<4x16x1xf32> to vector<4x16x128xf32>
    %23 = arith.mulf %22, %6 : vector<4x16x128xf32>
    %24 = vector.broadcast %20 : vector<4x1x128xf32> to vector<4x16x128xf32>
    %25 = arith.subf %23, %24 : vector<4x16x128xf32>
    %26 = vector.broadcast %21 : vector<1x1x128xf32> to vector<4x16x128xf32>
    %27 = arith.mulf %26, %25 : vector<4x16x128xf32>
    %c0_11 = arith.constant 0 : index
    %c0_12 = arith.constant 0 : index
    %c0_13 = arith.constant 0 : index
    %28 = vector.load %arg3[%c0_11, %c0_12, %c0_13] : memref<4x16x128xf32, #tpu.memory_space<vmem>>, vector<4x16x128xf32>
    tpu.vector_store %arg3[%c0_11, %c0_12, %c0_13], %27 {strides = array<i32>} : memref<4x16x128xf32, #tpu.memory_space<vmem>>, vector<4x16x128xf32>,
    return
  }
  func.func @transform_0(%arg0: i32) -> (i32, i32, i32) {
    %c0_i32 = arith.constant 0 : i32
    %c0_i32_0 = arith.constant 0 : i32
    %c0_i32_1 = arith.constant 0 : i32
    return %arg0, %c0_i32, %c0_i32_0 : i32, i32, i32
  }
  func.func @transform_1(%arg0: i32) -> (i32, i32, i32) {
    %c0_i32 = arith.constant 0 : i32
    %c0_i32_0 = arith.constant 0 : i32
    %c0_i32_1 = arith.constant 0 : i32
    %c0_i32_2 = arith.constant 0 : i32
    return %c0_i32, %c0_i32_0, %c0_i32_1 : i32, i32, i32
  }
  func.func @transform_2(%arg0: i32) -> (i32, i32, i32) {
    %c0_i32 = arith.constant 0 : i32
    %c0_i32_0 = arith.constant 0 : i32
    %c0_i32_1 = arith.constant 0 : i32
    return %arg0, %c0_i32, %c0_i32_0 : i32, i32, i32
  }
}

</mosaic_0001>

<llo_original>
// kernel: tpu_custom_call.1
$region0: #{tpu_custom_call.1}
  #allocation0 [shape = 'u32[]', space=smem, size = 0x4, offset = 0x4, fixed_abs, tag = 'smem constant byte address 0x4 - core index']
  #allocation1 [shape = 'u32[72,128]{1,0:T(1,128)}', space=vmem, size = 0x9000, scoped, tag = 'internal scratch']
  %s0 = inlined_call_operand.hbm [shape: f32[4,16,128], index: 0, kind: input, shape index: {}]
  %s1 = inlined_call_operand.hbm [shape: f32[1,1,128], index: 1, kind: input, shape index: {}]
  %s2 = inlined_call_operand.hbm [shape: f32[4,16,128], index: 2, kind: output, shape index: {}]
  %s3 = sld [smem:[#allocation0]]
  $region26: #{tpu_custom_call.1} parent=0
    _
  %s5 = ssub.s32 1, %s3
  %s6 = scalar_select 0, %s5, %s3
  $region1: #{tpu_custom_call.1} parent=0
    #allocation2 [shape = 'u8[32768]{0}', space=vmem, size = 0x8000, scoped, tag = 'input window, operand 0, single buffered']
    #allocation3 [shape = 's32[1]{0}', space=sflag, size = 0x4, scoped, tag = 'scoped memory for tpu_custom_call.1']
    #allocation4 [shape = 's32[1]{0}', space=sflag, size = 0x4, scoped, tag = 'scoped memory for tpu_custom_call.1']
    #allocation5 [shape = 'u8[512]{0}', space=vmem, size = 0x400, scoped, tag = 'input window, operand 1, single buffered']
    #allocation6 [shape = 's32[1]{0}', space=sflag, size = 0x4, scoped, tag = 'scoped memory for tpu_custom_call.1']
    #allocation7 [shape = 'u8[32768]{0}', space=vmem, size = 0x8000, scoped, tag = 'output window, operand 0, single buffered']
    %7 = vsyncpa [#allocation3], 0
    %8 = vsyncpa [#allocation6], 0
    %9 = vsyncpa [#allocation4], 0
    // Predicated region
    $region2: #{tpu_custom_call.1} parent=1 // pred_check
      _
    $region3: #{tpu_custom_call.1} parent=1 // pred_check_branch
      %11 = sbr.rel (0) target = $region5
    $region4: #{tpu_custom_call.1} parent=1 // pred_region
      %13 = vsyncadd [#allocation3], 0
      %s14 = sshll.u32 %s0, 4
      %s15 = int_to_ptr.hbm [resolvable:$true] %s14
      %s16 = sshll.u32 [#allocation2], 4
      %s17 = int_to_ptr.vmem [resolvable:$true] %s16
      %22 = dma.hbm_to_vmem [thread:$0]  %s15, 1024, %s17, [#allocation3], 128, 128, 8
    $region5: #{tpu_custom_call.1} parent=1 // pred_fallthru
      _
    // Predicated region
    $region6: #{tpu_custom_call.1} parent=1 // pred_check
      _
    $region7: #{tpu_custom_call.1} parent=1 // pred_check_branch
      %24 = sbr.rel (0) target = $region9
    $region8: #{tpu_custom_call.1} parent=1 // pred_region
      %26 = vsyncadd [#allocation6], 0
      %s28 = sshll.u32 %s1, 4
      %s29 = int_to_ptr.hbm [resolvable:$true] %s28
      %s30 = sshll.u32 [#allocation5], 4
      %s31 = int_to_ptr.vmem [resolvable:$true] %s30
      %33 = dma.hbm_to_vmem [thread:$0]  %s29, 16, %s31, [#allocation6]
    $region9: #{tpu_custom_call.1} parent=1 // pred_fallthru
      _
    // Predicated region
    $region10: #{tpu_custom_call.1} parent=1 // pred_check
      _
    $region11: #{tpu_custom_call.1} parent=1 // pred_check_branch
      %35 = sbr.rel (0) target = $region13
    $region12: #{tpu_custom_call.1} parent=1 // pred_region
      %37 = dma.done [#allocation3], 1024
    $region13: #{tpu_custom_call.1} parent=1 // pred_fallthru
      _
    // Predicated region
    $region14: #{tpu_custom_call.1} parent=1 // pred_check
      _
    $region15: #{tpu_custom_call.1} parent=1 // pred_check_branch
      %39 = sbr.rel (0) target = $region17
    $region16: #{tpu_custom_call.1} parent=1 // pred_region
      %41 = dma.done [#allocation6], 16
    $region17: #{tpu_custom_call.1} parent=1 // pred_fallthru
      _
    %v42 = vld [vmem:[#allocation2] sm:$0xff]
    %v43 = vld [vmem:[#allocation2 + $0x8] sm:$0xff]
    %v44 = vld [vmem:[#allocation2 + $0x10] sm:$0xff]
    %v45 = vld [vmem:[#allocation2 + $0x18] sm:$0xff]
    %v46 = vld [vmem:[#allocation2 + $0x20] sm:$0xff]
    %v47 = vld [vmem:[#allocation2 + $0x28] sm:$0xff]
    %v48 = vld [vmem:[#allocation2 + $0x30] sm:$0xff]
    %v49 = vld [vmem:[#allocation2 + $0x38] sm:$0xff]
    %50 = vadd.xlane.f32.xlu0 %v42
    %v51 = vpop.xlane.xlu0 %50
    %52 = vadd.xlane.f32.xlu0 %v43
    %v53 = vpop.xlane.xlu0 %52
    %54 = vadd.xlane.f32.xlu0 %v44
    %v55 = vpop.xlane.xlu0 %54
    %56 = vadd.xlane.f32.xlu0 %v45
    %v57 = vpop.xlane.xlu0 %56
    %58 = vadd.xlane.f32.xlu0 %v46
    %v59 = vpop.xlane.xlu0 %58
    %60 = vadd.xlane.f32.xlu0 %v47
    %v61 = vpop.xlane.xlu0 %60
    %62 = vadd.xlane.f32.xlu0 %v48
    %v63 = vpop.xlane.xlu0 %62
    %64 = vadd.xlane.f32.xlu0 %v49
    %v65 = vpop.xlane.xlu0 %64
    %v66 = vmul.f32 %v51, 0.0078125
    %v67 = vmul.f32 %v53, 0.0078125
    %v68 = vmul.f32 %v55, 0.0078125
    %v69 = vmul.f32 %v57, 0.0078125
    %v70 = vmul.f32 %v59, 0.0078125
    %v71 = vmul.f32 %v61, 0.0078125
    %v72 = vmul.f32 %v63, 0.0078125
    %v73 = vmul.f32 %v65, 0.0078125
    %v74 = vsub.f32 %v42, %v66
    %v75 = vsub.f32 %v43, %v67
    %v76 = vsub.f32 %v44, %v68
    %v77 = vsub.f32 %v45, %v69
    %v78 = vsub.f32 %v46, %v70
    %v79 = vsub.f32 %v47, %v71
    %v80 = vsub.f32 %v48, %v72
    %v81 = vsub.f32 %v49, %v73
    %v82 = vmul.f32 %v74, %v74
    %v83 = vmul.f32 %v75, %v75
    %v84 = vmul.f32 %v76, %v76
    %v85 = vmul.f32 %v77, %v77
    %v86 = vmul.f32 %v78, %v78
    %v87 = vmul.f32 %v79, %v79
    %v88 = vmul.f32 %v80, %v80
    %v89 = vmul.f32 %v81, %v81
    %90 = vadd.xlane.f32.xlu0 %v82
    %v91 = vpop.xlane.xlu0 %90
    %92 = vadd.xlane.f32.xlu0 %v83
    %v93 = vpop.xlane.xlu0 %92
    %94 = vadd.xlane.f32.xlu0 %v84
    %v95 = vpop.xlane.xlu0 %94
    %96 = vadd.xlane.f32.xlu0 %v85
    %v97 = vpop.xlane.xlu0 %96
    %98 = vadd.xlane.f32.xlu0 %v86
    %v99 = vpop.xlane.xlu0 %98
    %100 = vadd.xlane.f32.xlu0 %v87
    %v101 = vpop.xlane.xlu0 %100
    %102 = vadd.xlane.f32.xlu0 %v88
    %v103 = vpop.xlane.xlu0 %102
    %104 = vadd.xlane.f32.xlu0 %v89
    %v105 = vpop.xlane.xlu0 %104
    %v106 = vmul.f32 %v91, 0.0078125
    %v107 = vmul.f32 %v93, 0.0078125
    %v108 = vmul.f32 %v95, 0.0078125
    %v109 = vmul.f32 %v97, 0.0078125
    %v110 = vmul.f32 %v99, 0.0078125
    %v111 = vmul.f32 %v101, 0.0078125
    %v112 = vmul.f32 %v103, 0.0078125
    %v113 = vmul.f32 %v105, 0.0078125
    %v114 = vadd.f32 %v106, 1e-05
    %v115 = vadd.f32 %v107, 1e-05
    %v116 = vadd.f32 %v108, 1e-05
    %v117 = vadd.f32 %v109, 1e-05
    %v118 = vadd.f32 %v110, 1e-05
    %v119 = vadd.f32 %v111, 1e-05
    %v120 = vadd.f32 %v112, 1e-05
    %v121 = vadd.f32 %v113, 1e-05
    %v122 = vrsqrt.pop %v114
    %v123 = vmul.f32 %v122, %v114
    %v124 = vmul.f32 %v123, %v122
    %v125 = vmul.f32 0.5, %v124
    %v126 = vsub.f32 1.5, %v125
    %v127 = vmul.f32 %v122, %v126
    %vm128 = vweird.f32 %v114
    %vm129 = vweird.f32 %v122
    %vm130 = vmor %vm128, %vm129
    %v131 = vsel %vm130, %v122, %v127
    %v132 = vrsqrt.pop %v115
    %v133 = vmul.f32 %v132, %v115
    %v134 = vmul.f32 %v133, %v132
    %v135 = vmul.f32 0.5, %v134
    %v136 = vsub.f32 1.5, %v135
    %v137 = vmul.f32 %v132, %v136
    %vm138 = vweird.f32 %v115
    %vm139 = vweird.f32 %v132
    %vm140 = vmor %vm138, %vm139
    %v141 = vsel %vm140, %v132, %v137
    %v142 = vrsqrt.pop %v116
    %v143 = vmul.f32 %v142, %v116
    %v144 = vmul.f32 %v143, %v142
    %v145 = vmul.f32 0.5, %v144
    %v146 = vsub.f32 1.5, %v145
    %v147 = vmul.f32 %v142, %v146
    %vm148 = vweird.f32 %v116
    %vm149 = vweird.f32 %v142
    %vm150 = vmor %vm148, %vm149
    %v151 = vsel %vm150, %v142, %v147
    %v152 = vrsqrt.pop %v117
    %v153 = vmul.f32 %v152, %v117
    %v154 = vmul.f32 %v153, %v152
    %v155 = vmul.f32 0.5, %v154
    %v156 = vsub.f32 1.5, %v155
    %v157 = vmul.f32 %v152, %v156
    %vm158 = vweird.f32 %v117
    %vm159 = vweird.f32 %v152
    %vm160 = vmor %vm158, %vm159
    %v161 = vsel %vm160, %v152, %v157
    %v162 = vrsqrt.pop %v118
    %v163 = vmul.f32 %v162, %v118
    %v164 = vmul.f32 %v163, %v162
    %v165 = vmul.f32 0.5, %v164
    %v166 = vsub.f32 1.5, %v165
    %v167 = vmul.f32 %v162, %v166
    %vm168 = vweird.f32 %v118
    %vm169 = vweird.f32 %v162
    %vm170 = vmor %vm168, %vm169
    %v171 = vsel %vm170, %v162, %v167
    %v172 = vrsqrt.pop %v119
    %v173 = vmul.f32 %v172, %v119
    %v174 = vmul.f32 %v173, %v172
    %v175 = vmul.f32 0.5, %v174
    %v176 = vsub.f32 1.5, %v175
    %v177 = vmul.f32 %v172, %v176
    %vm178 = vweird.f32 %v119
    %vm179 = vweird.f32 %v172
    %vm180 = vmor %vm178, %vm179
    %v181 = vsel %vm180, %v172, %v177
    %v182 = vrsqrt.pop %v120
    %v183 = vmul.f32 %v182, %v120
    %v184 = vmul.f32 %v183, %v182
    %v185 = vmul.f32 0.5, %v184
    %v186 = vsub.f32 1.5, %v185
    %v187 = vmul.f32 %v182, %v186
    %vm188 = vweird.f32 %v120
    %vm189 = vweird.f32 %v182
    %vm190 = vmor %vm188, %vm189
    %v191 = vsel %vm190, %v182, %v187
    %v192 = vrsqrt.pop %v121
    %v193 = vmul.f32 %v192, %v121
    %v194 = vmul.f32 %v193, %v192
    %v195 = vmul.f32 0.5, %v194
    %v196 = vsub.f32 1.5, %v195
    %v197 = vmul.f32 %v192, %v196
    %vm198 = vweird.f32 %v121
    %vm199 = vweird.f32 %v192
    %vm200 = vmor %vm198, %vm199
    %v201 = vsel %vm200, %v192, %v197
    %v202 = vmul.f32 %v131, %v74
    %v203 = vmul.f32 %v141, %v75
    %v204 = vmul.f32 %v151, %v76
    %v205 = vmul.f32 %v161, %v77
    %v206 = vmul.f32 %v171, %v78
    %v207 = vmul.f32 %v181, %v79
    %v208 = vmul.f32 %v191, %v80
    %v209 = vmul.f32 %v201, %v81
    %v210 = vadd.f32 %v202, %v203
    %v211 = vrot.slane %v210, 4
    %v212 = vadd.f32 %v210, %v211
    %v213 = vrot.slane %v212, 2
    %v214 = vadd.f32 %v212, %v213
    %v215 = vrot.slane %v214, 1
    %v216 = vadd.f32 %v214, %v215
    %v217 = vadd.f32 %v204, %v205
    %v218 = vrot.slane %v217, 4
    %v219 = vadd.f32 %v217, %v218
    %v220 = vrot.slane %v219, 2
    %v221 = vadd.f32 %v219, %v220
    %v222 = vrot.slane %v221, 1
    %v223 = vadd.f32 %v221, %v222
    %v224 = vadd.f32 %v206, %v207
    %v225 = vrot.slane %v224, 4
    %v226 = vadd.f32 %v224, %v225
    %v227 = vrot.slane %v226, 2
    %v228 = vadd.f32 %v226, %v227
    %v229 = vrot.slane %v228, 1
    %v230 = vadd.f32 %v228, %v229
    %v231 = vadd.f32 %v208, %v209
    %v232 = vrot.slane %v231, 4
    %v233 = vadd.f32 %v231, %v232
    %v234 = vrot.slane %v233, 2
    %v235 = vadd.f32 %v233, %v234
    %v236 = vrot.slane %v235, 1
    %v237 = vadd.f32 %v235, %v236
    %v238 = vmul.f32 %v216, 0.0625
    %v239 = vmul.f32 %v223, 0.0625
    %v240 = vmul.f32 %v230, 0.0625
    %v241 = vmul.f32 %v237, 0.0625
    %v242 = vld [vmem:[#allocation5] sm:$0x1]
    %v243 = vsub.f32 %v202, %v238
    %v244 = vsub.f32 %v203, %v238
    %v245 = vsub.f32 %v204, %v239
    %v246 = vsub.f32 %v205, %v239
    %v247 = vsub.f32 %v206, %v240
    %v248 = vsub.f32 %v207, %v240
    %v249 = vsub.f32 %v208, %v241
    %v250 = vsub.f32 %v209, %v241
    %v252 = vperm.slane %v242, 0
    %v254 = vmul.f32 %v252, %v243
    %v255 = vmul.f32 %v252, %v244
    %v256 = vmul.f32 %v252, %v245
    %v257 = vmul.f32 %v252, %v246
    %v258 = vmul.f32 %v252, %v247
    %v259 = vmul.f32 %v252, %v248
    %v260 = vmul.f32 %v252, %v249
    %v261 = vmul.f32 %v252, %v250
    %262 = vst [vmem:[#allocation7] sm:$0xff] %v254
    %263 = vst [vmem:[#allocation7 + $0x8] sm:$0xff] %v255
    %264 = vst [vmem:[#allocation7 + $0x10] sm:$0xff] %v256
    %265 = vst [vmem:[#allocation7 + $0x18] sm:$0xff] %v257
    %266 = vst [vmem:[#allocation7 + $0x20] sm:$0xff] %v258
    %267 = vst [vmem:[#allocation7 + $0x28] sm:$0xff] %v259
    %268 = vst [vmem:[#allocation7 + $0x30] sm:$0xff] %v260
    %269 = vst [vmem:[#allocation7 + $0x38] sm:$0xff] %v261
    // Predicated region
    $region18: #{tpu_custom_call.1} parent=1 // pred_check
      _
    $region19: #{tpu_custom_call.1} parent=1 // pred_check_branch
      %271 = sbr.rel (0) target = $region21
    $region20: #{tpu_custom_call.1} parent=1 // pred_region
      %273 = vsyncadd [#allocation4], 0
      %s274 = sshll.u32 [#allocation7], 4
      %s275 = int_to_ptr.vmem [resolvable:$true] %s274
      %s276 = sshll.u32 %s2, 4
      %s277 = int_to_ptr.hbm [resolvable:$true] %s276
      %282 = dma.vmem_to_hbm [thread:$0]  %s275, 1024, %s277, [#allocation4], 128, 128, 8
    $region21: #{tpu_custom_call.1} parent=1 // pred_fallthru
      _
    // Predicated region
    $region22: #{tpu_custom_call.1} parent=1 // pred_check
      _
    $region23: #{tpu_custom_call.1} parent=1 // pred_check_branch
      %284 = sbr.rel (0) target = $region25
    $region24: #{tpu_custom_call.1} parent=1 // pred_region
      %286 = dma.done [#allocation4], 1024
    $region25: #{tpu_custom_call.1} parent=1 // pred_fallthru
      _
    %287 = vsyncpa [#allocation3], 1
    %288 = vsyncpa [#allocation6], 1
    %289 = vsyncpa [#allocation4], 1

</llo_original>
